<compile_context>
chip_gen: v7x
topology: tpu7x:2x2x1
jax: 0.10.0
libtpu: 0.0.40
codegen_flags: <defaults>
</compile_context>

<pallas_src>
from functools import partial

import jax
import jax.numpy as jnp
from jax.experimental import pallas as pl
from jax.experimental.pallas import tpu as pltpu

BN_EPS = 1e-5   # torch.nn.BatchNorm1d default
LANE = 128      # TPU lane width


def regselection_kernel(x_ref, params_ref, o_ref, *, n_feat):
    # x_ref:      (N, P)         input features (f32)
    # params_ref: (P + 1, Lpad)  rows 0..P-1 : gamma-folded weight (P, Lpad)
    #                            row  P      : beta-folded bias    (1, Lpad)
    # o_ref:      (N, Lpad)      lane-dense logits (consumer slices [:, :L])
    x = x_ref[...]                                   # (N, P) f32
    n = x.shape[0]
    inv_n = jnp.float32(1.0 / n)

    # Batch statistics via XLU sublane reductions (N=8 is one f32 sublane
    # tile -> one XLU op each, in an otherwise-idle slot).  Centered variance
    # for numerical stability (matches PyTorch's computation).
    mean = jnp.sum(x, axis=0, keepdims=True) * inv_n            # (1, P)
    xc = x - mean                                                # (N, P) VPU
    var = jnp.sum(xc * xc, axis=0, keepdims=True) * inv_n        # (1, P)
    s = jax.lax.rsqrt(var + BN_EPS)                              # (1, P) EUP

    w = params_ref[:n_feat, :]                                   # (P, Lpad)
    b = params_ref[n_feat:n_feat + 1, :]                         # (1, Lpad)

    # One VPU multiply, one MXU dot, one VPU add.  No runtime bias fold.
    logits = jnp.dot(xc * s, w, preferred_element_type=jnp.float32) + b
    o_ref[...] = logits.astype(o_ref.dtype)


def prepare_params(gamma, beta, weight, bias):
    """One-time parameter preprocessing — keep OUTSIDE the per-call hot path.

    Folds the BatchNorm affine (gamma, beta) into the linear layer, transposes
    the PyTorch-layout weight to (P, L), zero-pads the label axis to a
    lane-dense multiple of 128, and packs weight + bias into a single array so
    the kernel needs only one parameter DMA.
    """
    num_labels, p = weight.shape
    w_t = weight.T.astype(jnp.float32)                                   # (P, L)
    w_fold = gamma.astype(jnp.float32)[:, None] * w_t                    # gamma fold
    b_fold = beta.astype(jnp.float32) @ w_t + bias.astype(jnp.float32)   # (L,)

    l_pad = ((num_labels + LANE - 1) // LANE) * LANE
    w_pad = jnp.zeros((p, l_pad), jnp.float32).at[:, :num_labels].set(w_fold)
    b_pad = jnp.zeros((1, l_pad), jnp.float32).at[:, :num_labels].set(b_fold)
    params = jnp.concatenate([w_pad, b_pad], axis=0)                     # (P+1, Lpad)
    return params, num_labels


@jax.jit
def regselection_forward(x, params):
    """x: (N, P) float32; params: output of prepare_params.

    Returns lane-padded logits (N, Lpad); the consumer slices/masks to
    num_labels (keeping the slice out of this call avoids an extra XLA
    fusion + HBM round trip on a tiny array).
    """
    n, p = x.shape
    l_pad = params.shape[1]
    flops = 2 * n * p * l_pad + 6 * n * p
    bytes_accessed = (n * p + (p + 1) * l_pad + n * l_pad) * 4
    return pl.pallas_call(
        partial(regselection_kernel, n_feat=p),
        out_shape=jax.ShapeDtypeStruct((n, l_pad), x.dtype),
        in_specs=[
            pl.BlockSpec((n, p), lambda: (0, 0)),
            pl.BlockSpec((p + 1, l_pad), lambda: (0, 0)),
        ],
        out_specs=pl.BlockSpec((n, l_pad), lambda: (0, 0)),
        cost_estimate=pl.CostEstimate(
            flops=flops, transcendentals=p, bytes_accessed=bytes_accessed),
        compiler_params=pltpu.CompilerParams(),
    )(x, params)


def regselection_reference(x, gamma, beta, weight, bias):
    """Pure-JAX reference matching PyTorch BatchNorm1d(train) + Linear."""
    mean = jnp.mean(x, axis=0, keepdims=True)
    var = jnp.mean((x - mean) ** 2, axis=0, keepdims=True)
    x_hat = (x - mean) / jnp.sqrt(var + BN_EPS)
    x_bn = x_hat * gamma[None, :] + beta[None, :]
    return x_bn @ weight.T + bias[None, :]


if __name__ == "__main__":
    # Small shapes consistent with forward(): x is (n_train, feat_dim).
    batch, feat_dim, num_labels = 8, 32, 4

    key = jax.random.PRNGKey(0)
    kx, kw = jax.random.split(key)

    x = jax.random.normal(kx, (batch, feat_dim), dtype=jnp.float32)

    # Deterministic parameter init mirroring __init__:
    #   BN: gamma = 1, beta = 0
    #   Linear: weight ~ N(0, 0.01), bias = 0   (reinit_head=True)
    gamma = jnp.ones((feat_dim,), dtype=jnp.float32)
    beta = jnp.zeros((feat_dim,), dtype=jnp.float32)
    weight = 0.01 * jax.random.normal(kw, (num_labels, feat_dim), dtype=jnp.float32)
    bias = jnp.zeros((num_labels,), dtype=jnp.float32)

    # TODO(synk): selection_vector / get_reg_loss / fit / running-stat updates
    # are training-time utilities not part of forward(); not implemented here.

    # One-time parameter prep (folding / transpose / padding / packing).
    params, nl = prepare_params(gamma, beta, weight, bias)

    out_padded = regselection_forward(x, params)
    out_padded = jax.block_until_ready(out_padded)

    # Consumer-side slice (outside the jitted forward) for verification only.
    out = out_padded[:, :nl]

    ref = regselection_reference(x, gamma, beta, weight, bias)
    assert out_padded.shape == (batch, LANE)
    assert out.shape == (batch, num_labels)
    assert jnp.allclose(out, ref, atol=1e-5, rtol=1e-5), "mismatch vs reference"
    # Padding lanes must be exactly zero (zero-padded weight/bias).
    assert jnp.all(out_padded[:, nl:] == 0.0)

    print("KERNEL_OK")
</pallas_src>

<mosaic_0001>
module attributes {stable_mosaic.version = 11 : i64} {
  func.func @regselection_kernel(%arg0: memref<8x32xf32, #tpu.memory_space<vmem>>, %arg1: memref<33x128xf32, #tpu.memory_space<vmem>>, %arg2: memref<8x128xf32, #tpu.memory_space<vmem>>) attributes {dimension_semantics = [], scalar_prefetch = 0 : i64, scratch_operands = 0 : i64, tpu.core_type = #tpu.core_type<tc>} {
    %c0 = arith.constant 0 : index
    %c0_0 = arith.constant 0 : index
    %0 = vector.load %arg0[%c0, %c0_0] : memref<8x32xf32, #tpu.memory_space<vmem>>, vector<8x32xf32>
    %cst = arith.constant dense<0.000000e+00> : vector<32xf32>
    %1 = vector.multi_reduction <add>, %0, %cst [0] : vector<8x32xf32> to vector<32xf32>
    %2 = vector.shape_cast %1 : vector<32xf32> to vector<1x32xf32>
    %cst_1 = arith.constant 1.250000e-01 : f32
    %3 = vector.broadcast %cst_1 : f32 to vector<1x32xf32>
    %4 = arith.mulf %2, %3 : vector<1x32xf32>
    %5 = vector.broadcast %4 : vector<1x32xf32> to vector<8x32xf32>
    %6 = arith.subf %0, %5 : vector<8x32xf32>
    %7 = arith.mulf %6, %6 : vector<8x32xf32>
    %cst_2 = arith.constant dense<0.000000e+00> : vector<32xf32>
    %8 = vector.multi_reduction <add>, %7, %cst_2 [0] : vector<8x32xf32> to vector<32xf32>
    %9 = vector.shape_cast %8 : vector<32xf32> to vector<1x32xf32>
    %cst_3 = arith.constant 1.250000e-01 : f32
    %10 = vector.broadcast %cst_3 : f32 to vector<1x32xf32>
    %11 = arith.mulf %9, %10 : vector<1x32xf32>
    %cst_4 = arith.constant 9.99999974E-6 : f32
    %12 = vector.broadcast %cst_4 : f32 to vector<1x32xf32>
    %13 = arith.addf %11, %12 : vector<1x32xf32>
    %14 = math.rsqrt %13 : vector<1x32xf32>
    %c0_5 = arith.constant 0 : index
    %c0_6 = arith.constant 0 : index
    %15 = vector.load %arg1[%c0_5, %c0_6] : memref<33x128xf32, #tpu.memory_space<vmem>>, vector<32x128xf32>
    %c32 = arith.constant 32 : index
    %c0_7 = arith.constant 0 : index
    %16 = vector.load %arg1[%c32, %c0_7] : memref<33x128xf32, #tpu.memory_space<vmem>>, vector<1x128xf32>
    %17 = vector.broadcast %14 : vector<1x32xf32> to vector<8x32xf32>
    %18 = arith.mulf %6, %17 : vector<8x32xf32>
    %cst_8 = arith.constant dense<0.000000e+00> : vector<8x128xf32>
    %19 = tpu.matmul %18, %15, %cst_8 {dimension_numbers = #tpu.dot_dimension_numbers<[1], [0], [0], [1], [0, 0, 1, 1], [], []>} : vector<8x32xf32>, vector<32x128xf32>, vector<8x128xf32> -> vector<8x128xf32>
    %20 = vector.broadcast %16 : vector<1x128xf32> to vector<8x128xf32>
    %21 = arith.addf %19, %20 : vector<8x128xf32>
    %c0_9 = arith.constant 0 : index
    %c0_10 = arith.constant 0 : index
    %22 = vector.load %arg2[%c0_9, %c0_10] : memref<8x128xf32, #tpu.memory_space<vmem>>, vector<8x128xf32>
    tpu.vector_store %arg2[%c0_9, %c0_10], %21 {strides = array<i32>} : memref<8x128xf32, #tpu.memory_space<vmem>>, vector<8x128xf32>,
    return
  }
}

</mosaic_0001>

<llo_original>
// kernel: regselection_forward.1
$region0: #{regselection_forward.1}
  #allocation0 [shape = 'u32[]', space=smem, size = 0x4, offset = 0x4, fixed_abs, tag = 'smem constant byte address 0x4 - core index']
  #allocation1 [shape = 'u32[144,128]{1,0:T(1,128)}', space=vmem, size = 0x12000, scoped, tag = 'internal scratch']
  %s0 = inlined_call_operand.hbm [shape: f32[8,32], index: 0, kind: input, shape index: {}]
  %s1 = inlined_call_operand.hbm [shape: f32[33,128], index: 1, kind: input, shape index: {}]
  %s2 = inlined_call_operand.hbm [shape: f32[8,128], index: 2, kind: output, shape index: {}]
  %s3 = sld [smem:[#allocation0]]
  $region26: #{regselection_forward.1} parent=0
    _
  %s5 = ssub.s32 1, %s3
  %s6 = scalar_select 0, %s5, %s3
  $region1: #{regselection_forward.1} parent=0
    #allocation2 [shape = 'u8[4096]{0}', space=vmem, size = 0x1000, scoped, tag = 'input window, operand 0, single buffered']
    #allocation3 [shape = 's32[1]{0}', space=sflag, size = 0x4, scoped, tag = 'scoped memory for regselection_forward.1']
    #allocation4 [shape = 's32[1]{0}', space=sflag, size = 0x4, scoped, tag = 'scoped memory for regselection_forward.1']
    #allocation5 [shape = 'u8[20480]{0}', space=vmem, size = 0x5000, scoped, tag = 'input window, operand 1, single buffered']
    #allocation6 [shape = 's32[1]{0}', space=sflag, size = 0x4, scoped, tag = 'scoped memory for regselection_forward.1']
    #allocation7 [shape = 'u8[4096]{0}', space=vmem, size = 0x1000, scoped, tag = 'output window, operand 0, single buffered']
    %7 = vsyncpa [#allocation3], 0
    %8 = vsyncpa [#allocation6], 0
    %9 = vsyncpa [#allocation4], 0
    // Predicated region
    $region2: #{regselection_forward.1} parent=1 // pred_check
      _
    $region3: #{regselection_forward.1} parent=1 // pred_check_branch
      %11 = sbr.rel (0) target = $region5
    $region4: #{regselection_forward.1} parent=1 // pred_region
      %s13 = ssub.s32 128, 128
      %14 = vsyncadd [#allocation3], %s13
      %s16 = sshll.u32 [#allocation2], 4
      %s17 = int_to_ptr.vmem [resolvable:$true] %s16
      %19 = dma.hbm_to_vmem [thread:$0]  %s0, 128, %s17, [#allocation3]
    $region5: #{regselection_forward.1} parent=1 // pred_fallthru
      _
    // Predicated region
    $region6: #{regselection_forward.1} parent=1 // pred_check
      _
    $region7: #{regselection_forward.1} parent=1 // pred_check_branch
      %21 = sbr.rel (0) target = $region9
    $region8: #{regselection_forward.1} parent=1 // pred_region
      %s23 = ssub.s32 640, 640
      %24 = vsyncadd [#allocation6], %s23
      %s25 = sshll.u32 [#allocation5], 4
      %s26 = int_to_ptr.vmem [resolvable:$true] %s25
      %31 = dma.hbm_to_vmem [thread:$0]  %s1, 640, %s26, [#allocation6], 128, 128, 8
    $region9: #{regselection_forward.1} parent=1 // pred_fallthru
      _
    // Predicated region
    $region10: #{regselection_forward.1} parent=1 // pred_check
      _
    $region11: #{regselection_forward.1} parent=1 // pred_check_branch
      %33 = sbr.rel (0) target = $region13
    $region12: #{regselection_forward.1} parent=1 // pred_region
      %34 = dma.done [#allocation3], 128
    $region13: #{regselection_forward.1} parent=1 // pred_fallthru
      _
    // Predicated region
    $region14: #{regselection_forward.1} parent=1 // pred_check
      _
    $region15: #{regselection_forward.1} parent=1 // pred_check_branch
      %36 = sbr.rel (0) target = $region17
    $region16: #{regselection_forward.1} parent=1 // pred_region
      %37 = dma.done [#allocation6], 640
    $region17: #{regselection_forward.1} parent=1 // pred_fallthru
      _
    %v38 = vld [vmem:[#allocation2] sm:$0xff]
    %vm39 = vcmask 261120
    %v40 = vsel %vm39, %v38, 0.0
    %v41 = vrot.slane %v40, 4
    %v42 = vadd.f32 %v40, %v41
    %v43 = vrot.slane %v42, 2
    %v44 = vadd.f32 %v42, %v43
    %v45 = vrot.slane %v44, 1
    %v46 = vadd.f32 %v44, %v45
    %v47 = vmul.f32 %v46, 0.125
    %v48 = vsub.f32 %v38, %v47
    %v49 = vmul.f32 %v48, %v48
    %v50 = vsel %vm39, %v49, 0.0
    %v51 = vrot.slane %v50, 4
    %v52 = vadd.f32 %v50, %v51
    %v53 = vrot.slane %v52, 2
    %v54 = vadd.f32 %v52, %v53
    %v55 = vrot.slane %v54, 1
    %v56 = vadd.f32 %v54, %v55
    %v57 = vmul.f32 %v56, 0.125
    %v58 = vadd.f32 %v57, 1e-05
    %v59 = vrsqrt.pop %v58
    %v60 = vld [vmem:[#allocation5] sm:$0xff]
    %v61 = vld [vmem:[#allocation5 + $0x8] sm:$0xff]
    %v62 = vld [vmem:[#allocation5 + $0x10] sm:$0xff]
    %v63 = vld [vmem:[#allocation5 + $0x18] sm:$0xff]
    %v64 = vld [vmem:[#allocation5 + $0x20] sm:$0x1]
    %v65 = vmul.f32 %v48, %v59
    %v66 = vlaneseq
    %v67 = vshrl.u32 %v66, 7
    %v68 = vsub.s32 0, %v67
    %v69 = vrot.slane %v64, %v68
    %v71 = vsel %vm39, %v65, 0
    %73 = vmatprep.subr.mxu0 0.0
    %74 = vmatpush1.msra.mxu0 %v60
    %75 = vmatprep.subr.mxu0 0.0
    %76 = vmatpush1.msra.mxu0 %v61
    %77 = vmatprep.subr.mxu0 0.0
    %78 = vmatpush1.msra.mxu0 %v62
    %79 = vmatprep.subr.mxu0 0.0
    %80 = vmatpush1.msra.mxu0 %v63
    %81 = vmatprep.subr.mxu0 0.0
    %82 = vmatpush1.msra.mxu0 0.0
    %83 = vmatprep.subr.mxu0 0.0
    %84 = vmatpush1.msra.mxu0 0.0
    %85 = vmatprep.subr.mxu0 0.0
    %86 = vmatpush1.msra.mxu0 0.0
    %87 = vmatprep.subr.mxu0 0.0
    %88 = vmatpush1.msra.mxu0 0.0
    %89 = vmatprep.subr.mxu0 0.0
    %90 = vmatpush1.msra.mxu0 0.0
    %91 = vmatprep.subr.mxu0 0.0
    %92 = vmatpush1.msra.mxu0 0.0
    %93 = vmatprep.subr.mxu0 0.0
    %94 = vmatpush1.msra.mxu0 0.0
    %95 = vmatprep.subr.mxu0 0.0
    %96 = vmatpush1.msra.mxu0 0.0
    %97 = vmatprep.subr.mxu0 0.0
    %98 = vmatpush1.msra.mxu0 0.0
    %99 = vmatprep.subr.mxu0 0.0
    %100 = vmatpush1.msra.mxu0 0.0
    %101 = vmatprep.subr.mxu0 0.0
    %102 = vmatpush1.msra.mxu0 0.0
    %103 = vmatprep.subr.mxu0 0.0
    %104 = vmatpush1.msra.mxu0 0.0
    %105 = vmatprep.subr.mxu0 0.0
    %106 = vmatpush1.msra.mxu0 0.0
    %107 = vmatprep.subr.mxu0 0.0
    %108 = vmatpush1.msra.mxu0 0.0
    %109 = vmatprep.subr.mxu0 0.0
    %110 = vmatpush1.msra.mxu0 0.0
    %111 = vmatprep.subr.mxu0 0.0
    %112 = vmatpush1.msra.mxu0 0.0
    %113 = vmatprep.subr.mxu0 0.0
    %114 = vmatpush1.msra.mxu0 0.0
    %115 = vmatprep.subr.mxu0 0.0
    %116 = vmatpush1.msra.mxu0 0.0
    %117 = vmatprep.subr.mxu0 0.0
    %118 = vmatpush1.msra.mxu0 0.0
    %119 = vmatprep.subr.mxu0 0.0
    %120 = vmatpush1.msra.mxu0 0.0
    %121 = vmatprep.subr.mxu0 0.0
    %122 = vmatpush1.msra.mxu0 0.0
    %123 = vmatprep.subr.mxu0 0.0
    %124 = vmatpush1.msra.mxu0 0.0
    %125 = vmatprep.subr.mxu0 0.0
    %126 = vmatpush1.msra.mxu0 0.0
    %127 = vmatprep.subr.mxu0 0.0
    %128 = vmatpush1.msra.mxu0 0.0
    %129 = vmatprep.subr.mxu0 0.0
    %130 = vmatpush1.msra.mxu0 0.0
    %131 = vmatprep.subr.mxu0 0.0
    %132 = vmatpush1.msra.mxu0 0.0
    %133 = vmatprep.subr.mxu0 0.0
    %134 = vmatpush1.msra.mxu0 0.0
    %135 = vmatprep.subr.mxu0 0.0
    %136 = vmatpush1.msra.mxu0 0.0
    %137 = vmatprep.mubr.f32.mxu0 0.0
    %138 = vmatmul.mubr.f32.gmra.mrb[0].mxu0 %v71
    %v139 = vpop.f32.mrb[0].mxu0
    %v140 = vadd.f32 %v69, %v139
    %v141 = vpop.f32.mrb[0].mxu0
    %142 = vdwg.mxu0
    %143 = vst [vmem:[#allocation7] sm:$0xff] %v140
    // Predicated region
    $region18: #{regselection_forward.1} parent=1 // pred_check
      _
    $region19: #{regselection_forward.1} parent=1 // pred_check_branch
      %145 = sbr.rel (0) target = $region21
    $region20: #{regselection_forward.1} parent=1 // pred_region
      %s147 = ssub.s32 128, 128
      %148 = vsyncadd [#allocation4], %s147
      %s150 = sshll.u32 [#allocation7], 4
      %s151 = int_to_ptr.vmem [resolvable:$true] %s150
      %153 = dma.vmem_to_hbm [thread:$0]  %s151, 128, %s2, [#allocation4]
    $region21: #{regselection_forward.1} parent=1 // pred_fallthru
      _
    // Predicated region
    $region22: #{regselection_forward.1} parent=1 // pred_check
      _
    $region23: #{regselection_forward.1} parent=1 // pred_check_branch
      %155 = sbr.rel (0) target = $region25
    $region24: #{regselection_forward.1} parent=1 // pred_region
      %156 = dma.done [#allocation4], 128
    $region25: #{regselection_forward.1} parent=1 // pred_fallthru
      _
    %157 = vsyncpa [#allocation3], 1
    %158 = vsyncpa [#allocation6], 1
    %159 = vsyncpa [#allocation4], 1

</llo_original>
